<compile_context>
chip_gen: v7x
topology: tpu7x:2x2x1
jax: 0.10.0
libtpu: 0.0.40
codegen_flags: <defaults>
</compile_context>

<pallas_src>
import functools

import jax
import jax.numpy as jnp
from jax.experimental import pallas as pl
from jax.experimental.pallas import tpu as pltpu

LANE = 128  # TPU vreg lane width; pad K/N/H to this for dense MXU + store paths


def mlp_kernel(x_ref, w1_ref, b1_ref, w3_ref, b3_ref, o_ref):
    # ---- layer 1: (tm, Kp) @ (Kp, Hp) -> (tm, Hp), bf16 operands, f32 accum
    h = jnp.dot(x_ref[...], w1_ref[...], preferred_element_type=jnp.float32)
    h = h + b1_ref[...]                                  # (1, Hp) broadcast
    # sigmoid = 1 / (1 + exp(-h)); exp and approx reciprocal both run on the
    # EUP slot, leaving the VALU free for the adds.
    h = pl.reciprocal(1.0 + jnp.exp(-h), approx=True)
    # ---- layer 3: (tm, Hp) @ (Hp, Np) -> (tm, Np); Np = 128 -> lane-dense store
    o = jnp.dot(h.astype(jnp.bfloat16), w3_ref[...],
                preferred_element_type=jnp.float32)
    o_ref[...] = (o + b3_ref[...]).astype(o_ref.dtype)


@functools.partial(jax.jit, static_argnames=("out_size", "tm"))
def mlp_forward(x, w1p, b1p, w3p, b3p, *, out_size, tm=128):
    """x: (B, K) f32.  w1p: (Kp, Hp) bf16, w3p: (Hp, Np) bf16, biases f32 (padded)."""
    B, K = x.shape
    Kp, Hp = w1p.shape
    Np = w3p.shape[1]

    # pad batch to a multiple of tm and K up to Kp (zeros -> no-op in the matmul),
    # cast activations to bf16 for the MXU (accumulation stays f32 in-kernel).
    Bp = pl.cdiv(B, tm) * tm
    xp = jnp.pad(x, ((0, Bp - B), (0, Kp - K))).astype(jnp.bfloat16)

    out = pl.pallas_call(
        mlp_kernel,
        out_shape=jax.ShapeDtypeStruct((Bp, Np), jnp.float32),
        grid=(Bp // tm,),
        in_specs=[
            pl.BlockSpec((tm, Kp), lambda i: (i, 0)),    # x: tiled over batch
            pl.BlockSpec((Kp, Hp), lambda i: (0, 0)),    # W1: resident (const index)
            pl.BlockSpec((1, Hp), lambda i: (0, 0)),     # b1: resident
            pl.BlockSpec((Hp, Np), lambda i: (0, 0)),    # W3: resident
            pl.BlockSpec((1, Np), lambda i: (0, 0)),     # b3: resident
        ],
        out_specs=pl.BlockSpec((tm, Np), lambda i: (i, 0)),
        compiler_params=pltpu.CompilerParams(
            dimension_semantics=("parallel",),           # shard batch tiles across TCs (v7x)
        ),
    )(xp, w1p, b1p, w3p, b3p)

    # un-pad: keep the real batch rows and the first out_size lanes
    return out[:B, :out_size]


def init_params(key, input_size, hidden_size, output_size):
    """PyTorch nn.Linear default init: U(-1/sqrt(fan_in), 1/sqrt(fan_in)).
    Weights stored as (in, out) = transpose of torch's (out, in)."""
    k1, k2, k3, k4 = jax.random.split(key, 4)
    lim1 = 1.0 / jnp.sqrt(input_size)
    lim3 = 1.0 / jnp.sqrt(hidden_size)
    w1 = jax.random.uniform(k1, (input_size, hidden_size), jnp.float32, -lim1, lim1)
    b1 = jax.random.uniform(k2, (1, hidden_size), jnp.float32, -lim1, lim1)
    w3 = jax.random.uniform(k3, (hidden_size, output_size), jnp.float32, -lim3, lim3)
    b3 = jax.random.uniform(k4, (1, output_size), jnp.float32, -lim3, lim3)
    # TODO(synk): linear2 (hidden -> hidden-100) exists in __init__ but is never
    # used in forward, so it is intentionally not materialized.
    return w1, b1, w3, b3


def pack_params(w1, b1, w3, b3):
    """One-time padding + bf16 cast so the kernel sees lane-dense, MXU-friendly
    operands. Zero padding is mathematically a no-op (padded K rows / H cols of
    W3 are zero, padded output lanes are sliced off)."""
    K, H = w1.shape
    N = w3.shape[1]
    Kp = pl.cdiv(K, LANE) * LANE
    Hp = pl.cdiv(H, LANE) * LANE
    Np = pl.cdiv(N, LANE) * LANE
    w1p = jnp.pad(w1, ((0, Kp - K), (0, Hp - H))).astype(jnp.bfloat16)
    b1p = jnp.pad(b1, ((0, 0), (0, Hp - H)))
    w3p = jnp.pad(w3, ((0, Hp - H), (0, Np - N))).astype(jnp.bfloat16)
    b3p = jnp.pad(b3, ((0, 0), (0, Np - N)))
    return w1p, b1p, w3p, b3p


if __name__ == "__main__":
    input_size, hidden_size, output_size = 32, 128, 16
    batch = 256  # fill the MXU M dimension and amortize fixed pallas_call overhead

    key = jax.random.PRNGKey(0)
    kx, kp = jax.random.split(key)
    x = jax.random.normal(kx, (batch, input_size), jnp.float32)

    w1, b1, w3, b3 = init_params(kp, input_size, hidden_size, output_size)
    w1p, b1p, w3p, b3p = pack_params(w1, b1, w3, b3)

    out = mlp_forward(x, w1p, b1p, w3p, b3p, out_size=output_size, tm=128)
    jax.block_until_ready(out)

    # reference in plain f32 JAX (unpadded params); bf16 matmul operands +
    # approx reciprocal in the kernel -> loosened tolerance.
    h_ref = jax.nn.sigmoid(x @ w1 + b1)
    y_ref = h_ref @ w3 + b3
    assert out.shape == (batch, output_size), out.shape
    assert jnp.allclose(out, y_ref, atol=2e-2, rtol=2e-2), float(
        jnp.max(jnp.abs(out - y_ref)))

    print("KERNEL_OK")
</pallas_src>

<mosaic_0001>
module attributes {stable_mosaic.version = 11 : i64} {
  func.func @mlp_kernel(%arg0: i32, %arg1: memref<128x128xbf16, #tpu.memory_space<vmem>>, %arg2: memref<128x128xbf16, #tpu.memory_space<vmem>>, %arg3: memref<1x128xf32, #tpu.memory_space<vmem>>, %arg4: memref<128x128xbf16, #tpu.memory_space<vmem>>, %arg5: memref<1x128xf32, #tpu.memory_space<vmem>>, %arg6: memref<128x128xf32, #tpu.memory_space<vmem>>) attributes {dimension_semantics = [#tpu.dimension_semantics<parallel>], iteration_bounds = array<i64: 2>, scalar_prefetch = 0 : i64, scratch_operands = 0 : i64, tpu.core_type = #tpu.core_type<tc>, window_params = [{transform_indices = @transform_0, window_bounds = array<i64: 128, 128>}, {pipeline_mode = #tpu.pipeline_mode<synchronous>, transform_indices = @transform_1, window_bounds = array<i64: 128, 128>}, {pipeline_mode = #tpu.pipeline_mode<synchronous>, transform_indices = @transform_2, window_bounds = array<i64: 1, 128>}, {pipeline_mode = #tpu.pipeline_mode<synchronous>, transform_indices = @transform_3, window_bounds = array<i64: 128, 128>}, {pipeline_mode = #tpu.pipeline_mode<synchronous>, transform_indices = @transform_4, window_bounds = array<i64: 1, 128>}, {transform_indices = @transform_5, window_bounds = array<i64: 128, 128>}]} {
    %c0 = arith.constant 0 : index
    %c0_0 = arith.constant 0 : index
    %0 = vector.load %arg1[%c0, %c0_0] : memref<128x128xbf16, #tpu.memory_space<vmem>>, vector<128x128xbf16>
    %c0_1 = arith.constant 0 : index
    %c0_2 = arith.constant 0 : index
    %1 = vector.load %arg2[%c0_1, %c0_2] : memref<128x128xbf16, #tpu.memory_space<vmem>>, vector<128x128xbf16>
    %cst = arith.constant dense<0.000000e+00> : vector<128x128xf32>
    %2 = tpu.matmul %0, %1, %cst {dimension_numbers = #tpu.dot_dimension_numbers<[1], [0], [0], [1], [0, 0, 1, 1], [], []>} : vector<128x128xbf16>, vector<128x128xbf16>, vector<128x128xf32> -> vector<128x128xf32>
    %c0_3 = arith.constant 0 : index
    %c0_4 = arith.constant 0 : index
    %3 = vector.load %arg3[%c0_3, %c0_4] : memref<1x128xf32, #tpu.memory_space<vmem>>, vector<1x128xf32>
    %4 = vector.broadcast %3 : vector<1x128xf32> to vector<128x128xf32>
    %5 = arith.addf %2, %4 : vector<128x128xf32>
    %cst_5 = arith.constant 0.000000e+00 : f32
    %6 = vector.broadcast %cst_5 : f32 to vector<128x128xf32>
    %7 = arith.subf %6, %5 : vector<128x128xf32>
    %8 = math.exp %7 : vector<128x128xf32>
    %cst_6 = arith.constant 1.000000e+00 : f32
    %9 = vector.broadcast %cst_6 : f32 to vector<128x128xf32>
    %10 = arith.addf %9, %8 : vector<128x128xf32>
    %11 = tpu.reciprocal %10 {approx = true} : vector<128x128xf32> -> vector<128x128xf32>
    %12 = arith.truncf %11 : vector<128x128xf32> to vector<128x128xbf16>
    %c0_7 = arith.constant 0 : index
    %c0_8 = arith.constant 0 : index
    %13 = vector.load %arg4[%c0_7, %c0_8] : memref<128x128xbf16, #tpu.memory_space<vmem>>, vector<128x128xbf16>
    %cst_9 = arith.constant dense<0.000000e+00> : vector<128x128xf32>
    %14 = tpu.matmul %12, %13, %cst_9 {dimension_numbers = #tpu.dot_dimension_numbers<[1], [0], [0], [1], [0, 0, 1, 1], [], []>} : vector<128x128xbf16>, vector<128x128xbf16>, vector<128x128xf32> -> vector<128x128xf32>
    %c0_10 = arith.constant 0 : index
    %c0_11 = arith.constant 0 : index
    %15 = vector.load %arg5[%c0_10, %c0_11] : memref<1x128xf32, #tpu.memory_space<vmem>>, vector<1x128xf32>
    %16 = vector.broadcast %15 : vector<1x128xf32> to vector<128x128xf32>
    %17 = arith.addf %14, %16 : vector<128x128xf32>
    %c0_12 = arith.constant 0 : index
    %c0_13 = arith.constant 0 : index
    %18 = vector.load %arg6[%c0_12, %c0_13] : memref<128x128xf32, #tpu.memory_space<vmem>>, vector<128x128xf32>
    tpu.vector_store %arg6[%c0_12, %c0_13], %17 {strides = array<i32>} : memref<128x128xf32, #tpu.memory_space<vmem>>, vector<128x128xf32>,
    return
  }
  func.func @transform_0(%arg0: i32) -> (i32, i32) {
    %c0_i32 = arith.constant 0 : i32
    %c0_i32_0 = arith.constant 0 : i32
    return %arg0, %c0_i32 : i32, i32
  }
  func.func @transform_1(%arg0: i32) -> (i32, i32) {
    %c0_i32 = arith.constant 0 : i32
    %c0_i32_0 = arith.constant 0 : i32
    %c0_i32_1 = arith.constant 0 : i32
    return %c0_i32, %c0_i32_0 : i32, i32
  }
  func.func @transform_2(%arg0: i32) -> (i32, i32) {
    %c0_i32 = arith.constant 0 : i32
    %c0_i32_0 = arith.constant 0 : i32
    %c0_i32_1 = arith.constant 0 : i32
    return %c0_i32, %c0_i32_0 : i32, i32
  }
  func.func @transform_3(%arg0: i32) -> (i32, i32) {
    %c0_i32 = arith.constant 0 : i32
    %c0_i32_0 = arith.constant 0 : i32
    %c0_i32_1 = arith.constant 0 : i32
    return %c0_i32, %c0_i32_0 : i32, i32
  }
  func.func @transform_4(%arg0: i32) -> (i32, i32) {
    %c0_i32 = arith.constant 0 : i32
    %c0_i32_0 = arith.constant 0 : i32
    %c0_i32_1 = arith.constant 0 : i32
    return %c0_i32, %c0_i32_0 : i32, i32
  }
  func.func @transform_5(%arg0: i32) -> (i32, i32) {
    %c0_i32 = arith.constant 0 : i32
    %c0_i32_0 = arith.constant 0 : i32
    return %arg0, %c0_i32 : i32, i32
  }
}

</mosaic_0001>

<llo_original>
// kernel: mlp_forward.1
$region0: #{mlp_forward.1}
  #allocation0 [shape = 'u32[]', space=smem, size = 0x4, offset = 0x4, fixed_abs, tag = 'smem constant byte address 0x4 - core index']
  #allocation1 [shape = 'u32[144,128]{1,0:T(1,128)}', space=vmem, size = 0x12000, scoped, tag = 'internal scratch']
  %s0 = inlined_call_operand.vmem [shape: bf16[256,128], index: 0, kind: input, shape index: {}]
  %s1 = inlined_call_operand.vmem [shape: bf16[128,128], index: 1, kind: input, shape index: {}]
  %s2 = inlined_call_operand.vmem [shape: f32[1,128], index: 2, kind: input, shape index: {}]
  %s3 = inlined_call_operand.vmem [shape: bf16[128,128], index: 3, kind: input, shape index: {}]
  %s4 = inlined_call_operand.vmem [shape: f32[1,128], index: 4, kind: input, shape index: {}]
  %s5 = inlined_call_operand.vmem [shape: f32[256,128], index: 5, kind: output, shape index: {}]
  %s6 = sld [smem:[#allocation0]]
  $region53: #{mlp_forward.1} parent=0
    _
  %s8 = ssub.s32 1, %s6
  %s9 = scalar_select 0, %s8, %s6
  loop: start=0, step=1, limit=4
  $region2: #{mlp_forward.1} parent=0 // loop_pre_header
    _
  $region3: #{mlp_forward.1} parent=0 // loop_header
    %s11 = sphi 0, %s15
    %p12 = scmp.ge.s32.totalorder %s11, 4
    %s21 = sphi 0, %s23
    %s24 = sphi 0, %s21
    %s25 = sphi 0, %s24
    %s41 = sphi 0, %s25
    %s45 = sphi 0, %s45
    %s47 = sphi 0, %s45
    %s48 = sphi 0, %s47
    %s62 = sphi 0, %s48
    %s66 = sphi 0, %s66
    %s68 = sphi 0, %s66
    %s69 = sphi 0, %s68
    %s83 = sphi 0, %s69
    %s87 = sphi 0, %s87
    %s89 = sphi 0, %s87
    %s90 = sphi 0, %s89
    %s104 = sphi 0, %s90
    %s108 = sphi 0, %s108
    %s110 = sphi 0, %s108
    %s111 = sphi 0, %s110
    %s125 = sphi 0, %s111
    %s131 = sphi 0, %s133
    %s134 = sphi 0, %s131
    %s135 = sphi 0, %s134
    %s151 = sphi 0, %s135
  $region4: #{mlp_forward.1} parent=0 // loop_header_branch
    %14 = sbr.rel (%p12) target = $region8
  $region5: #{mlp_forward.1} parent=0 // loop_body
    %s16 = ssub.s32 %s11, 1
    %s17 = ssub.s32 %s11, 2
    %s18 = sadd.s32 %s11, 1
    %s19 = ssub.s32 %s11, %s18
    %p20 = scmp.eq.s32.totalorder %s19, 0
    %s22 = sadd.s32 %s21, 1
    %s23 = scalar_select %p20, %s21, %s22
    %p26 = pneg %p20
    %p27 = scmp.eq.s32.totalorder %s11, 1
    %p28 = por %p26, %p27
    %p29 = scmp.ne.s32.totalorder %s21, %s24
    %p30 = scmp.eq.s32.totalorder %s11, 0
    %p31 = por %p29, %p30
    %p32 = scmp.ne.s32.totalorder %s21, %s24
    %p33 = scmp.eq.s32.totalorder %s16, 1
    %p34 = por %p32, %p33
    %p35 = scmp.ne.s32.totalorder %s24, %s25
    %p36 = scmp.eq.s32.totalorder %s16, 0
    %p37 = por %p35, %p36
    %p38 = scmp.ne.s32.totalorder %s24, %s25
    %p39 = scmp.eq.s32.totalorder %s17, 1
    %p40 = por %p38, %p39
    %p42 = scmp.ne.s32.totalorder %s25, %s41
    %p43 = scmp.eq.s32.totalorder %s17, 0
    %p44 = por %p42, %p43
    %s46 = sadd.s32 %s45, 1
    %p49 = scmp.eq.s32.totalorder %s11, 1
    %p50 = scmp.ne.s32.totalorder %s45, %s47
    %p51 = scmp.eq.s32.totalorder %s11, 0
    %p52 = por %p50, %p51
    %p53 = scmp.ne.s32.totalorder %s45, %s47
    %p54 = scmp.eq.s32.totalorder %s16, 1
    %p55 = por %p53, %p54
    %p56 = scmp.ne.s32.totalorder %s47, %s48
    %p57 = scmp.eq.s32.totalorder %s16, 0
    %p58 = por %p56, %p57
    %p59 = scmp.ne.s32.totalorder %s47, %s48
    %p60 = scmp.eq.s32.totalorder %s17, 1
    %p61 = por %p59, %p60
    %p63 = scmp.ne.s32.totalorder %s48, %s62
    %p64 = scmp.eq.s32.totalorder %s17, 0
    %p65 = por %p63, %p64
    %s67 = sadd.s32 %s66, 1
    %p70 = scmp.eq.s32.totalorder %s11, 1
    %p71 = scmp.ne.s32.totalorder %s66, %s68
    %p72 = scmp.eq.s32.totalorder %s11, 0
    %p73 = por %p71, %p72
    %p74 = scmp.ne.s32.totalorder %s66, %s68
    %p75 = scmp.eq.s32.totalorder %s16, 1
    %p76 = por %p74, %p75
    %p77 = scmp.ne.s32.totalorder %s68, %s69
    %p78 = scmp.eq.s32.totalorder %s16, 0
    %p79 = por %p77, %p78
    %p80 = scmp.ne.s32.totalorder %s68, %s69
    %p81 = scmp.eq.s32.totalorder %s17, 1
    %p82 = por %p80, %p81
    %p84 = scmp.ne.s32.totalorder %s69, %s83
    %p85 = scmp.eq.s32.totalorder %s17, 0
    %p86 = por %p84, %p85
    %s88 = sadd.s32 %s87, 1
    %p91 = scmp.eq.s32.totalorder %s11, 1
    %p92 = scmp.ne.s32.totalorder %s87, %s89
    %p93 = scmp.eq.s32.totalorder %s11, 0
    %p94 = por %p92, %p93
    %p95 = scmp.ne.s32.totalorder %s87, %s89
    %p96 = scmp.eq.s32.totalorder %s16, 1
    %p97 = por %p95, %p96
    %p98 = scmp.ne.s32.totalorder %s89, %s90
    %p99 = scmp.eq.s32.totalorder %s16, 0
    %p100 = por %p98, %p99
    %p101 = scmp.ne.s32.totalorder %s89, %s90
    %p102 = scmp.eq.s32.totalorder %s17, 1
    %p103 = por %p101, %p102
    %p105 = scmp.ne.s32.totalorder %s90, %s104
    %p106 = scmp.eq.s32.totalorder %s17, 0
    %p107 = por %p105, %p106
    %s109 = sadd.s32 %s108, 1
    %p112 = scmp.eq.s32.totalorder %s11, 1
    %p113 = scmp.ne.s32.totalorder %s108, %s110
    %p114 = scmp.eq.s32.totalorder %s11, 0
    %p115 = por %p113, %p114
    %p116 = scmp.ne.s32.totalorder %s108, %s110
    %p117 = scmp.eq.s32.totalorder %s16, 1
    %p118 = por %p116, %p117
    %p119 = scmp.ne.s32.totalorder %s110, %s111
    %p120 = scmp.eq.s32.totalorder %s16, 0
    %p121 = por %p119, %p120
    %p122 = scmp.ne.s32.totalorder %s110, %s111
    %p123 = scmp.eq.s32.totalorder %s17, 1
    %p124 = por %p122, %p123
    %p126 = scmp.ne.s32.totalorder %s111, %s125
    %p127 = scmp.eq.s32.totalorder %s17, 0
    %p128 = por %p126, %p127
    %s129 = ssub.s32 %s11, %s18
    %p130 = scmp.eq.s32.totalorder %s129, 0
    %s132 = sadd.s32 %s131, 1
    %s133 = scalar_select %p130, %s131, %s132
    %p136 = pneg %p130
    %p137 = scmp.eq.s32.totalorder %s11, 1
    %p138 = por %p136, %p137
    %p139 = scmp.ne.s32.totalorder %s131, %s134
    %p140 = scmp.eq.s32.totalorder %s11, 0
    %p141 = por %p139, %p140
    %p142 = scmp.ne.s32.totalorder %s131, %s134
    %p143 = scmp.eq.s32.totalorder %s16, 1
    %p144 = por %p142, %p143
    %p145 = scmp.ne.s32.totalorder %s134, %s135
    %p146 = scmp.eq.s32.totalorder %s16, 0
    %p147 = por %p145, %p146
    %p148 = scmp.ne.s32.totalorder %s134, %s135
    %p149 = scmp.eq.s32.totalorder %s17, 1
    %p150 = por %p148, %p149
    %p152 = scmp.ne.s32.totalorder %s135, %s151
    %p153 = scmp.eq.s32.totalorder %s17, 0
    %p154 = por %p152, %p153
    %p155 = scmp.le.s32.totalorder 1, %s11
    %p156 = scmp.lt.s32.totalorder %s11, 3
    %p157 = pnand %p155, %p156
    %p158 = pneg %p157
    // Predicated region
    $region9: #{mlp_forward.1} parent=5 // pred_check
      _
    $region10: #{mlp_forward.1} parent=5 // pred_check_branch
      %160 = sbr.rel (%p157) target = $region12
    $region11: #{mlp_forward.1} parent=5 // pred_region
      %s161 = ssub.s32 %s11, 1
      // Predicated region
      $region13: #{mlp_forward.1} parent=11 // pred_check
        %p162 = pneg %p58
      $region14: #{mlp_forward.1} parent=11 // pred_check_branch
        %164 = sbr.rel (%p162) target = $region16
      $region15: #{mlp_forward.1} parent=11 // pred_region
        _
      $region16: #{mlp_forward.1} parent=11 // pred_fallthru
        _
      // Predicated region
      $region17: #{mlp_forward.1} parent=11 // pred_check
        %p165 = pneg %p79
      $region18: #{mlp_forward.1} parent=11 // pred_check_branch
        %167 = sbr.rel (%p165) target = $region20
      $region19: #{mlp_forward.1} parent=11 // pred_region
        _
      $region20: #{mlp_forward.1} parent=11 // pred_fallthru
        _
      // Predicated region
      $region21: #{mlp_forward.1} parent=11 // pred_check
        %p168 = pneg %p100
      $region22: #{mlp_forward.1} parent=11 // pred_check_branch
        %170 = sbr.rel (%p168) target = $region24
      $region23: #{mlp_forward.1} parent=11 // pred_region
        _
      $region24: #{mlp_forward.1} parent=11 // pred_fallthru
        _
      // Predicated region
      $region25: #{mlp_forward.1} parent=11 // pred_check
        %p171 = pneg %p121
      $region26: #{mlp_forward.1} parent=11 // pred_check_branch
        %173 = sbr.rel (%p171) target = $region28
      $region27: #{mlp_forward.1} parent=11 // pred_region
        _
      $region28: #{mlp_forward.1} parent=11 // pred_fallthru
        _
    $region12: #{mlp_forward.1} parent=5 // pred_fallthru
      _
    %p174 = scmp.lt.s32.totalorder %s11, 2
    // Predicated region
    $region29: #{mlp_forward.1} parent=5 // pred_check
      %p175 = pneg %p174
    $region30: #{mlp_forward.1} parent=5 // pred_check_branch
      %177 = sbr.rel (%p175) target = $region32
    $region31: #{mlp_forward.1} parent=5 // pred_region
      // Predicated region
      $region33: #{mlp_forward.1} parent=31 // pred_check
        %p178 = pneg %p31
      $region34: #{mlp_forward.1} parent=31 // pred_check_branch
        %180 = sbr.rel (%p178) target = $region36
      $region35: #{mlp_forward.1} parent=31 // pred_region
        %s181 = smul.u32 16, %s11
        %p182 = scmp.lt.s32.totalorder %s181, 31
        %s183 = scalar_select %p182, %s181, 31
        %s184 = smul.addr %s183, 4
        %s185 = scalar_lea.vmem %s0, %s184
        %s186 = smul.u32 16, %s11
      $region36: #{mlp_forward.1} parent=31 // pred_fallthru
        _
    $region32: #{mlp_forward.1} parent=5 // pred_fallthru
      _
    %p187 = scmp.le.s32.totalorder 1, %s11
    %p188 = scmp.lt.s32.totalorder %s11, 3
    %p189 = pnand %p187, %p188
    %p190 = pneg %p189
    // Predicated region
    $region37: #{mlp_forward.1} parent=5 // pred_check
      _
    $region38: #{mlp_forward.1} parent=5 // pred_check_branch
      %192 = sbr.rel (%p189) target = $region40
    $region39: #{mlp_forward.1} parent=5 // pred_region
      %s193 = ssub.s32 %s11, 1
      %s194 = smul.u32 16, %s16
      %p195 = scmp.lt.s32.totalorder %s194, 31
      %s196 = scalar_select %p195, %s194, 31
      %s197 = smul.addr %s196, 4
      %s198 = scalar_lea.vmem %s0, %s197
      %p199 = pneg %p37
      %p200 = pneg %p34
      %p201 = pneg %p58
      %p202 = pneg %p55
      %p203 = pneg %p79
      %p204 = pneg %p76
      %p205 = pneg %p100
      %p206 = pneg %p97
      %p207 = pneg %p121
      %p208 = pneg %p118
      %p209 = pneg %p147
      %p210 = pneg %p144
      %s211 = smul.u32 16, %s16
      %p212 = scmp.lt.s32.totalorder %s211, 31
      %s213 = scalar_select %p212, %s211, 31
      %s214 = smul.addr %s213, 8
      %s215 = scalar_lea.vmem %s5, %s214
      %s216 = smul.u32 16, %s16
      %p217 = scmp.lt.s32.totalorder %s216, 31
      %s218 = scalar_select %p217, %s216, 31
      %s219 = smul.addr %s218, 4
      %s220 = scalar_lea.vmem %s0, %s219
      %s221 = smul.u32 16, %s16
      %s222 = smul.u32 16, %s16
      %p223 = scmp.lt.s32.totalorder %s222, 31
      %s224 = scalar_select %p223, %s222, 31
      %s225 = smul.addr %s224, 8
      %s226 = scalar_lea.vmem %s5, %s225
      %s227 = smul.u32 16, %s16
      %v229 = vld [vmem:[%s220] sm:$0xf]
      %v230 = vld [vmem:[%s220 + $0x4] sm:$0xf]
      %v231 = vld [vmem:[%s220 + $0x8] sm:$0xf]
      %v232 = vld [vmem:[%s220 + $0xc] sm:$0xf]
      %v233 = vld [vmem:[%s220 + $0x10] sm:$0xf]
      %v234 = vld [vmem:[%s220 + $0x14] sm:$0xf]
      %v235 = vld [vmem:[%s220 + $0x18] sm:$0xf]
      %v236 = vld [vmem:[%s220 + $0x1c] sm:$0xf]
      %v237 = vld [vmem:[%s220 + $0x20] sm:$0xf]
      %v238 = vld [vmem:[%s220 + $0x24] sm:$0xf]
      %v239 = vld [vmem:[%s220 + $0x28] sm:$0xf]
      %v240 = vld [vmem:[%s220 + $0x2c] sm:$0xf]
      %v241 = vld [vmem:[%s220 + $0x30] sm:$0xf]
      %v242 = vld [vmem:[%s220 + $0x34] sm:$0xf]
      %v243 = vld [vmem:[%s220 + $0x38] sm:$0xf]
      %v244 = vld [vmem:[%s220 + $0x3c] sm:$0xf]
      %v245 = vld [vmem:[%s1] sm:$0xf]
      %v246 = vld [vmem:[%s1 + $0x4] sm:$0xf]
      %v247 = vld [vmem:[%s1 + $0x8] sm:$0xf]
      %v248 = vld [vmem:[%s1 + $0xc] sm:$0xf]
      %v249 = vld [vmem:[%s1 + $0x10] sm:$0xf]
      %v250 = vld [vmem:[%s1 + $0x14] sm:$0xf]
      %v251 = vld [vmem:[%s1 + $0x18] sm:$0xf]
      %v252 = vld [vmem:[%s1 + $0x1c] sm:$0xf]
      %v253 = vld [vmem:[%s1 + $0x20] sm:$0xf]
      %v254 = vld [vmem:[%s1 + $0x24] sm:$0xf]
      %v255 = vld [vmem:[%s1 + $0x28] sm:$0xf]
      %v256 = vld [vmem:[%s1 + $0x2c] sm:$0xf]
      %v257 = vld [vmem:[%s1 + $0x30] sm:$0xf]
      %v258 = vld [vmem:[%s1 + $0x34] sm:$0xf]
      %v259 = vld [vmem:[%s1 + $0x38] sm:$0xf]
      %v260 = vld [vmem:[%s1 + $0x3c] sm:$0xf]
      %v261 = vld [vmem:[%s2] sm:$0x1]
      %v263 = vlaneseq
      %v264 = vshrl.u32 %v263, 7
      %v265 = vsub.s32 0, %v264
      %v266 = vrot.slane %v261, %v265
      %v284 = vunpack.c.l.b16 %v229
      %v285 = vunpack.c.l.b16 %v230
      %v286 = vunpack.c.l.b16 %v231
      %v287 = vunpack.c.l.b16 %v232
      %v288 = vunpack.c.l.b16 %v233
      %v289 = vunpack.c.l.b16 %v234
      %v290 = vunpack.c.l.b16 %v235
      %v291 = vunpack.c.l.b16 %v236
      %v292 = vunpack.c.l.b16 %v237
      %v293 = vunpack.c.l.b16 %v238
      %v294 = vunpack.c.l.b16 %v239
      %v295 = vunpack.c.l.b16 %v240
      %v296 = vunpack.c.l.b16 %v241
      %v297 = vunpack.c.l.b16 %v242
      %v298 = vunpack.c.l.b16 %v243
      %v299 = vunpack.c.l.b16 %v244
      %v300 = vpack.c.b16 %v285, %v284
      %v301 = vpack.c.b16 %v287, %v286
      %v302 = vpack.c.b16 %v289, %v288
      %v303 = vpack.c.b16 %v291, %v290
      %v304 = vpack.c.b16 %v293, %v292
      %v305 = vpack.c.b16 %v295, %v294
      %v306 = vpack.c.b16 %v297, %v296
      %v307 = vpack.c.b16 %v299, %v298
      %v332 = vunpack.c.l.b16 %v245
      %v333 = vunpack.c.l.b16 %v246
      %v334 = vunpack.c.l.b16 %v247
      %v335 = vunpack.c.l.b16 %v248
      %v336 = vunpack.c.l.b16 %v249
      %v337 = vunpack.c.l.b16 %v250
      %v338 = vunpack.c.l.b16 %v251
      %v339 = vunpack.c.l.b16 %v252
      %v340 = vunpack.c.l.b16 %v253
      %v341 = vunpack.c.l.b16 %v254
      %v342 = vunpack.c.l.b16 %v255
      %v343 = vunpack.c.l.b16 %v256
      %v344 = vunpack.c.l.b16 %v257
      %v345 = vunpack.c.l.b16 %v258
      %v346 = vunpack.c.l.b16 %v259
      %v347 = vunpack.c.l.b16 %v260
      %v348 = vpack.c.b16 %v333, %v332
      %v349 = vpack.c.b16 %v335, %v334
      %v350 = vpack.c.b16 %v337, %v336
      %v351 = vpack.c.b16 %v339, %v338
      %v352 = vpack.c.b16 %v341, %v340
      %v353 = vpack.c.b16 %v343, %v342
      %v354 = vpack.c.b16 %v345, %v344
      %v355 = vpack.c.b16 %v347, %v346
      %364 = vmatprep.subr.bf16.mxu0 0
      %365 = vmatpush1.bf16.msra.mxu0 %v348
      %366 = vmatprep.subr.bf16.mxu0 0
      %367 = vmatpush1.bf16.msra.mxu0 %v349
      %368 = vmatprep.subr.bf16.mxu0 0
      %369 = vmatpush1.bf16.msra.mxu0 %v350
      %370 = vmatprep.subr.bf16.mxu0 0
      %371 = vmatpush1.bf16.msra.mxu0 %v351
      %372 = vmatprep.subr.bf16.mxu0 0
      %373 = vmatpush1.bf16.msra.mxu0 %v352
      %374 = vmatprep.subr.bf16.mxu0 0
      %375 = vmatpush1.bf16.msra.mxu0 %v353
      %376 = vmatprep.subr.bf16.mxu0 0
      %377 = vmatpush1.bf16.msra.mxu0 %v354
      %378 = vmatprep.subr.bf16.mxu0 0
      %379 = vmatpush1.bf16.msra.mxu0 %v355
      %380 = vmatprep.subr.bf16.mxu0 0
      %381 = vmatpush1.bf16.msra.mxu0 0
      %382 = vmatprep.subr.bf16.mxu0 0
      %383 = vmatpush1.bf16.msra.mxu0 0
      %384 = vmatprep.subr.bf16.mxu0 0
      %385 = vmatpush1.bf16.msra.mxu0 0
      %386 = vmatprep.subr.bf16.mxu0 0
      %387 = vmatpush1.bf16.msra.mxu0 0
      %388 = vmatprep.subr.bf16.mxu0 0
      %389 = vmatpush1.bf16.msra.mxu0 0
      %390 = vmatprep.subr.bf16.mxu0 0
      %391 = vmatpush1.bf16.msra.mxu0 0
      %392 = vmatprep.subr.bf16.mxu0 0
      %393 = vmatpush1.bf16.msra.mxu0 0
      %394 = vmatprep.subr.bf16.mxu0 0
      %395 = vmatpush1.bf16.msra.mxu0 0
      %396 = vmatprep.mubr.bf16.mxu0 0
      %397 = vmatmul.mubr.bf16.gmra.mrb[0].mxu0 %v300
      %v398 = vpop.f32.mrb[0].mxu0
      %v399 = vadd.f32 %v266, %v398
      %v400 = vpop.f32.mrb[0].mxu0
      %v401 = vpop.f32.mrb[0].mxu0
      %v402 = vadd.f32 %v266, %v401
      %v403 = vpop.f32.mrb[0].mxu0
      %404 = vmatprep.mubr.bf16.mxu0 0
      %405 = vmatmul.mubr.bf16.gmra.mrb[0].mxu0 %v301
      %v406 = vpop.f32.mrb[0].mxu0
      %v407 = vadd.f32 %v266, %v406
      %v408 = vpop.f32.mrb[0].mxu0
      %v409 = vpop.f32.mrb[0].mxu0
      %v410 = vadd.f32 %v266, %v409
      %v411 = vpop.f32.mrb[0].mxu0
      %412 = vmatprep.mubr.bf16.mxu0 0
      %413 = vmatmul.mubr.bf16.gmra.mrb[0].mxu0 %v302
      %v414 = vpop.f32.mrb[0].mxu0
      %v415 = vadd.f32 %v266, %v414
      %v416 = vpop.f32.mrb[0].mxu0
      %v417 = vpop.f32.mrb[0].mxu0
      %v418 = vadd.f32 %v266, %v417
      %v419 = vpop.f32.mrb[0].mxu0
      %420 = vmatprep.mubr.bf16.mxu0 0
      %421 = vmatmul.mubr.bf16.gmra.mrb[0].mxu0 %v303
      %v422 = vpop.f32.mrb[0].mxu0
      %v423 = vadd.f32 %v266, %v422
      %v424 = vpop.f32.mrb[0].mxu0
      %v425 = vpop.f32.mrb[0].mxu0
      %v426 = vadd.f32 %v266, %v425
      %v427 = vpop.f32.mrb[0].mxu0
      %428 = vmatprep.mubr.bf16.mxu0 0
      %429 = vmatmul.mubr.bf16.gmra.mrb[0].mxu0 %v304
      %v430 = vpop.f32.mrb[0].mxu0
      %v431 = vadd.f32 %v266, %v430
      %v432 = vpop.f32.mrb[0].mxu0
      %v433 = vpop.f32.mrb[0].mxu0
      %v434 = vadd.f32 %v266, %v433
      %v435 = vpop.f32.mrb[0].mxu0
      %436 = vmatprep.mubr.bf16.mxu0 0
      %437 = vmatmul.mubr.bf16.gmra.mrb[0].mxu0 %v305
      %v438 = vpop.f32.mrb[0].mxu0
      %v439 = vadd.f32 %v266, %v438
      %v440 = vpop.f32.mrb[0].mxu0
      %v441 = vpop.f32.mrb[0].mxu0
      %v442 = vadd.f32 %v266, %v441
      %v443 = vpop.f32.mrb[0].mxu0
      %444 = vmatprep.mubr.bf16.mxu0 0
      %445 = vmatmul.mubr.bf16.gmra.mrb[0].mxu0 %v306
      %v446 = vpop.f32.mrb[0].mxu0
      %v447 = vadd.f32 %v266, %v446
      %v448 = vpop.f32.mrb[0].mxu0
      %v449 = vpop.f32.mrb[0].mxu0
      %v450 = vadd.f32 %v266, %v449
      %v451 = vpop.f32.mrb[0].mxu0
      %452 = vmatprep.mubr.bf16.mxu0 0
      %453 = vmatmul.mubr.bf16.gmra.mrb[0].mxu0 %v307
      %v454 = vpop.f32.mrb[0].mxu0
      %v455 = vadd.f32 %v266, %v454
      %v456 = vpop.f32.mrb[0].mxu0
      %v457 = vpop.f32.mrb[0].mxu0
      %v458 = vadd.f32 %v266, %v457
      %v459 = vpop.f32.mrb[0].mxu0
      %460 = vdwg.mxu0
      %v461 = vsub.f32 0.0, %v399
      %v462 = vsub.f32 0.0, %v402
      %v463 = vsub.f32 0.0, %v407
      %v464 = vsub.f32 0.0, %v410
      %v465 = vsub.f32 0.0, %v415
      %v466 = vsub.f32 0.0, %v418
      %v467 = vsub.f32 0.0, %v423
      %v468 = vsub.f32 0.0, %v426
      %v469 = vsub.f32 0.0, %v431
      %v470 = vsub.f32 0.0, %v434
      %v471 = vsub.f32 0.0, %v439
      %v472 = vsub.f32 0.0, %v442
      %v473 = vsub.f32 0.0, %v447
      %v474 = vsub.f32 0.0, %v450
      %v475 = vsub.f32 0.0, %v455
      %v476 = vsub.f32 0.0, %v458
      %v477 = vmul.f32 %v461, 1.442695
      %v478 = vpow.pop %v477
      %v479 = vmul.f32 %v462, 1.442695
      %v480 = vpow.pop %v479
      %v481 = vmul.f32 %v463, 1.442695
      %v482 = vpow.pop %v481
      %v483 = vmul.f32 %v464, 1.442695
      %v484 = vpow.pop %v483
      %v485 = vmul.f32 %v465, 1.442695
      %v486 = vpow.pop %v485
      %v487 = vmul.f32 %v466, 1.442695
      %v488 = vpow.pop %v487
      %v489 = vmul.f32 %v467, 1.442695
      %v490 = vpow.pop %v489
      %v491 = vmul.f32 %v468, 1.442695
      %v492 = vpow.pop %v491
      %v493 = vmul.f32 %v469, 1.442695
      %v494 = vpow.pop %v493
      %v495 = vmul.f32 %v470, 1.442695
      %v496 = vpow.pop %v495
      %v497 = vmul.f32 %v471, 1.442695
      %v498 = vpow.pop %v497
      %v499 = vmul.f32 %v472, 1.442695
      %v500 = vpow.pop %v499
      %v501 = vmul.f32 %v473, 1.442695
      %v502 = vpow.pop %v501
      %v503 = vmul.f32 %v474, 1.442695
      %v504 = vpow.pop %v503
      %v505 = vmul.f32 %v475, 1.442695
      %v506 = vpow.pop %v505
      %v507 = vmul.f32 %v476, 1.442695
      %v508 = vpow.pop %v507
      %v509 = vadd.f32 %v478, 1.0
      %v510 = vadd.f32 %v480, 1.0
      %v511 = vadd.f32 %v482, 1.0
      %v512 = vadd.f32 %v484, 1.0
      %v513 = vadd.f32 %v486, 1.0
      %v514 = vadd.f32 %v488, 1.0
      %v515 = vadd.f32 %v490, 1.0
      %v516 = vadd.f32 %v492, 1.0
      %v517 = vadd.f32 %v494, 1.0
      %v518 = vadd.f32 %v496, 1.0
      %v519 = vadd.f32 %v498, 1.0
      %v520 = vadd.f32 %v500, 1.0
      %v521 = vadd.f32 %v502, 1.0
      %v522 = vadd.f32 %v504, 1.0
      %v523 = vadd.f32 %v506, 1.0
      %v524 = vadd.f32 %v508, 1.0
      %v525 = vrcp.pop %v509
      %v526 = vrcp.pop %v510
      %v527 = vrcp.pop %v511
      %v528 = vrcp.pop %v512
      %v529 = vrcp.pop %v513
      %v530 = vrcp.pop %v514
      %v531 = vrcp.pop %v515
      %v532 = vrcp.pop %v516
      %v533 = vrcp.pop %v517
      %v534 = vrcp.pop %v518
      %v535 = vrcp.pop %v519
      %v536 = vrcp.pop %v520
      %v537 = vrcp.pop %v521
      %v538 = vrcp.pop %v522
      %v539 = vrcp.pop %v523
      %v540 = vrcp.pop %v524
      %v541 = vpack.c.bf16 %v526, %v525
      %v542 = vpack.c.bf16 %v528, %v527
      %v543 = vpack.c.bf16 %v530, %v529
      %v544 = vpack.c.bf16 %v532, %v531
      %v545 = vpack.c.bf16 %v534, %v533
      %v546 = vpack.c.bf16 %v536, %v535
      %v547 = vpack.c.bf16 %v538, %v537
      %v548 = vpack.c.bf16 %v540, %v539
      %v549 = vld [vmem:[%s3] sm:$0xf]
      %v550 = vld [vmem:[%s3 + $0x4] sm:$0xf]
      %v551 = vld [vmem:[%s3 + $0x8] sm:$0xf]
      %v552 = vld [vmem:[%s3 + $0xc] sm:$0xf]
      %v553 = vld [vmem:[%s3 + $0x10] sm:$0xf]
      %v554 = vld [vmem:[%s3 + $0x14] sm:$0xf]
      %v555 = vld [vmem:[%s3 + $0x18] sm:$0xf]
      %v556 = vld [vmem:[%s3 + $0x1c] sm:$0xf]
      %v557 = vld [vmem:[%s3 + $0x20] sm:$0xf]
      %v558 = vld [vmem:[%s3 + $0x24] sm:$0xf]
      %v559 = vld [vmem:[%s3 + $0x28] sm:$0xf]
      %v560 = vld [vmem:[%s3 + $0x2c] sm:$0xf]
      %v561 = vld [vmem:[%s3 + $0x30] sm:$0xf]
      %v562 = vld [vmem:[%s3 + $0x34] sm:$0xf]
      %v563 = vld [vmem:[%s3 + $0x38] sm:$0xf]
      %v564 = vld [vmem:[%s3 + $0x3c] sm:$0xf]
      %v565 = vld [vmem:[%s4] sm:$0x1]
      %v567 = vlaneseq
      %v568 = vshrl.u32 %v567, 7
      %v569 = vsub.s32 0, %v568
      %v570 = vrot.slane %v565, %v569
      %v588 = vunpack.c.l.b16 %v549
      %v589 = vunpack.c.l.b16 %v550
      %v590 = vunpack.c.l.b16 %v551
      %v591 = vunpack.c.l.b16 %v552
      %v592 = vunpack.c.l.b16 %v553
      %v593 = vunpack.c.l.b16 %v554
      %v594 = vunpack.c.l.b16 %v555
      %v595 = vunpack.c.l.b16 %v556
      %v596 = vunpack.c.l.b16 %v557
      %v597 = vunpack.c.l.b16 %v558
      %v598 = vunpack.c.l.b16 %v559
      %v599 = vunpack.c.l.b16 %v560
      %v600 = vunpack.c.l.b16 %v561
      %v601 = vunpack.c.l.b16 %v562
      %v602 = vunpack.c.l.b16 %v563
      %v603 = vunpack.c.l.b16 %v564
      %v604 = vpack.c.b16 %v589, %v588
      %v605 = vpack.c.b16 %v591, %v590
      %v606 = vpack.c.b16 %v593, %v592
      %v607 = vpack.c.b16 %v595, %v594
      %v608 = vpack.c.b16 %v597, %v596
      %v609 = vpack.c.b16 %v599, %v598
      %v610 = vpack.c.b16 %v601, %v600
      %v611 = vpack.c.b16 %v603, %v602
      %620 = vmatprep.subr.bf16.mxu0 0
      %621 = vmatpush1.bf16.msra.mxu0 %v604
      %622 = vmatprep.subr.bf16.mxu0 0
      %623 = vmatpush1.bf16.msra.mxu0 %v605
      %624 = vmatprep.subr.bf16.mxu0 0
      %625 = vmatpush1.bf16.msra.mxu0 %v606
      %626 = vmatprep.subr.bf16.mxu0 0
      %627 = vmatpush1.bf16.msra.mxu0 %v607
      %628 = vmatprep.subr.bf16.mxu0 0
      %629 = vmatpush1.bf16.msra.mxu0 %v608
      %630 = vmatprep.subr.bf16.mxu0 0
      %631 = vmatpush1.bf16.msra.mxu0 %v609
      %632 = vmatprep.subr.bf16.mxu0 0
      %633 = vmatpush1.bf16.msra.mxu0 %v610
      %634 = vmatprep.subr.bf16.mxu0 0
      %635 = vmatpush1.bf16.msra.mxu0 %v611
      %636 = vmatprep.subr.bf16.mxu0 0
      %637 = vmatpush1.bf16.msra.mxu0 0
      %638 = vmatprep.subr.bf16.mxu0 0
      %639 = vmatpush1.bf16.msra.mxu0 0
      %640 = vmatprep.subr.bf16.mxu0 0
      %641 = vmatpush1.bf16.msra.mxu0 0
      %642 = vmatprep.subr.bf16.mxu0 0
      %643 = vmatpush1.bf16.msra.mxu0 0
      %644 = vmatprep.subr.bf16.mxu0 0
      %645 = vmatpush1.bf16.msra.mxu0 0
      %646 = vmatprep.subr.bf16.mxu0 0
      %647 = vmatpush1.bf16.msra.mxu0 0
      %648 = vmatprep.subr.bf16.mxu0 0
      %649 = vmatpush1.bf16.msra.mxu0 0
      %650 = vmatprep.subr.bf16.mxu0 0
      %651 = vmatpush1.bf16.msra.mxu0 0
      %652 = vmatprep.mubr.bf16.mxu0 0
      %653 = vmatmul.mubr.bf16.gmra.mrb[0].mxu0 %v541
      %v654 = vpop.f32.mrb[0].mxu0
      %v655 = vadd.f32 %v570, %v654
      %v656 = vpop.f32.mrb[0].mxu0
      %v657 = vpop.f32.mrb[0].mxu0
      %v658 = vadd.f32 %v570, %v657
      %v659 = vpop.f32.mrb[0].mxu0
      %660 = vmatprep.mubr.bf16.mxu0 0
      %661 = vmatmul.mubr.bf16.gmra.mrb[0].mxu0 %v542
      %v662 = vpop.f32.mrb[0].mxu0
      %v663 = vadd.f32 %v570, %v662
      %v664 = vpop.f32.mrb[0].mxu0
      %v665 = vpop.f32.mrb[0].mxu0
      %v666 = vadd.f32 %v570, %v665
      %v667 = vpop.f32.mrb[0].mxu0
      %668 = vmatprep.mubr.bf16.mxu0 0
      %669 = vmatmul.mubr.bf16.gmra.mrb[0].mxu0 %v543
      %v670 = vpop.f32.mrb[0].mxu0
      %v671 = vadd.f32 %v570, %v670
      %v672 = vpop.f32.mrb[0].mxu0
      %v673 = vpop.f32.mrb[0].mxu0
      %v674 = vadd.f32 %v570, %v673
      %v675 = vpop.f32.mrb[0].mxu0
      %676 = vmatprep.mubr.bf16.mxu0 0
      %677 = vmatmul.mubr.bf16.gmra.mrb[0].mxu0 %v544
      %v678 = vpop.f32.mrb[0].mxu0
      %v679 = vadd.f32 %v570, %v678
      %v680 = vpop.f32.mrb[0].mxu0
      %v681 = vpop.f32.mrb[0].mxu0
      %v682 = vadd.f32 %v570, %v681
      %v683 = vpop.f32.mrb[0].mxu0
      %684 = vmatprep.mubr.bf16.mxu0 0
      %685 = vmatmul.mubr.bf16.gmra.mrb[0].mxu0 %v545
      %v686 = vpop.f32.mrb[0].mxu0
      %v687 = vadd.f32 %v570, %v686
      %v688 = vpop.f32.mrb[0].mxu0
      %v689 = vpop.f32.mrb[0].mxu0
      %v690 = vadd.f32 %v570, %v689
      %v691 = vpop.f32.mrb[0].mxu0
      %692 = vmatprep.mubr.bf16.mxu0 0
      %693 = vmatmul.mubr.bf16.gmra.mrb[0].mxu0 %v546
      %v694 = vpop.f32.mrb[0].mxu0
      %v695 = vadd.f32 %v570, %v694
      %v696 = vpop.f32.mrb[0].mxu0
      %v697 = vpop.f32.mrb[0].mxu0
      %v698 = vadd.f32 %v570, %v697
      %v699 = vpop.f32.mrb[0].mxu0
      %700 = vmatprep.mubr.bf16.mxu0 0
      %701 = vmatmul.mubr.bf16.gmra.mrb[0].mxu0 %v547
      %v702 = vpop.f32.mrb[0].mxu0
      %v703 = vadd.f32 %v570, %v702
      %v704 = vpop.f32.mrb[0].mxu0
      %v705 = vpop.f32.mrb[0].mxu0
      %v706 = vadd.f32 %v570, %v705
      %v707 = vpop.f32.mrb[0].mxu0
      %708 = vmatprep.mubr.bf16.mxu0 0
      %709 = vmatmul.mubr.bf16.gmra.mrb[0].mxu0 %v548
      %v710 = vpop.f32.mrb[0].mxu0
      %v711 = vadd.f32 %v570, %v710
      %v712 = vpop.f32.mrb[0].mxu0
      %v713 = vpop.f32.mrb[0].mxu0
      %v714 = vadd.f32 %v570, %v713
      %v715 = vpop.f32.mrb[0].mxu0
      %716 = vdwg.mxu0
      %717 = vst [vmem:[%s226] sm:$0xff] %v655
      %718 = vst [vmem:[%s226 + $0x8] sm:$0xff] %v658
      %719 = vst [vmem:[%s226 + $0x10] sm:$0xff] %v663
      %720 = vst [vmem:[%s226 + $0x18] sm:$0xff] %v666
      %721 = vst [vmem:[%s226 + $0x20] sm:$0xff] %v671
      %722 = vst [vmem:[%s226 + $0x28] sm:$0xff] %v674
      %723 = vst [vmem:[%s226 + $0x30] sm:$0xff] %v679
      %724 = vst [vmem:[%s226 + $0x38] sm:$0xff] %v682
      %725 = vst [vmem:[%s226 + $0x40] sm:$0xff] %v687
      %726 = vst [vmem:[%s226 + $0x48] sm:$0xff] %v690
      %727 = vst [vmem:[%s226 + $0x50] sm:$0xff] %v695
      %728 = vst [vmem:[%s226 + $0x58] sm:$0xff] %v698
      %729 = vst [vmem:[%s226 + $0x60] sm:$0xff] %v703
      %730 = vst [vmem:[%s226 + $0x68] sm:$0xff] %v706
      %731 = vst [vmem:[%s226 + $0x70] sm:$0xff] %v711
      %732 = vst [vmem:[%s226 + $0x78] sm:$0xff] %v714
      %s733 = smul.u32 16, %s16
      %p734 = scmp.lt.s32.totalorder %s733, 31
      %s735 = scalar_select %p734, %s733, 31
      %s736 = smul.addr %s735, 8
      %s737 = scalar_lea.vmem %s5, %s736
      // Predicated region
      $region41: #{mlp_forward.1} parent=39 // pred_check
        %p738 = pneg %p144
      $region42: #{mlp_forward.1} parent=39 // pred_check_branch
        %740 = sbr.rel (%p738) target = $region44
      $region43: #{mlp_forward.1} parent=39 // pred_region
        %s741 = smul.u32 16, %s16
      $region44: #{mlp_forward.1} parent=39 // pred_fallthru
        _
    $region40: #{mlp_forward.1} parent=5 // pred_fallthru
      _
    %p742 = scmp.le.s32.totalorder 2, %s11
    // Predicated region
    $region45: #{mlp_forward.1} parent=5 // pred_check
      %p743 = pneg %p742
    $region46: #{mlp_forward.1} parent=5 // pred_check_branch
      %745 = sbr.rel (%p743) target = $region48
    $region47: #{mlp_forward.1} parent=5 // pred_region
      %s746 = ssub.s32 %s11, 2
      // Predicated region
      $region49: #{mlp_forward.1} parent=47 // pred_check
        %p747 = pneg %p150
      $region50: #{mlp_forward.1} parent=47 // pred_check_branch
        %749 = sbr.rel (%p747) target = $region52
      $region51: #{mlp_forward.1} parent=47 // pred_region
        %s750 = smul.u32 16, %s17
        %p751 = scmp.lt.s32.totalorder %s750, 31
        %s752 = scalar_select %p751, %s750, 31
        %s753 = smul.addr %s752, 8
        %s754 = scalar_lea.vmem %s5, %s753
      $region52: #{mlp_forward.1} parent=47 // pred_fallthru
        _
    $region48: #{mlp_forward.1} parent=5 // pred_fallthru
      _
  $region6: #{mlp_forward.1} parent=0 // loop_footer
    %s15 = sadd.s32 1, %s11
  $region7: #{mlp_forward.1} parent=0 // loop_footer_branch
    %10 = sbr.rel target = $region3
  $region8: #{mlp_forward.1} parent=0 // loop_exit
    _

</llo_original>
